<compile_context>
chip_gen: v7x
topology: tpu7x:2x2x1
jax: 0.10.0
libtpu: 0.0.40
codegen_flags: <defaults>
</compile_context>

<pallas_src>
import math

import jax
import jax.numpy as jnp
from jax.experimental import pallas as pl
from jax.experimental.pallas import tpu as pltpu


_LANE = 128                      # lane width (last dim)
_MAX_ROW_BLOCK = 256             # max rows per tile in the generic layout
_TARGET_TILE_BYTES = 4 * 1024 * 1024   # per x/out tile (double-buffered by Pallas)
_VMEM_LIMIT_BYTES = 32 * 1024 * 1024   # safe on v5e/v6e (128 MiB) and v7x (64 MiB)


def _alpha_mul_kernel(x_ref, alpha_ref, o_ref):
    # Pure VPU elementwise multiply. alpha broadcasts over sublanes when its
    # block has a single row; otherwise it is a same-shape tile.
    o_ref[...] = x_ref[...] * alpha_ref[...]


def _round_up(x, m):
    return ((x + m - 1) // m) * m


def _sublane_multiple(itemsize):
    # f32 -> 8, bf16 -> 16, int8/fp8 -> 32 (packed dtypes pack along sublanes).
    return max(8, (8 * 4) // max(1, itemsize))


def _split_dim(size, align, max_block):
    """Pick (block, padded_size): block % align == 0, block <= max(align, max_block),
    padded_size % block == 0, padded_size >= size, with minimal padding."""
    size_a = _round_up(size, align)
    max_block = max(align, (max_block // align) * align)
    if size_a <= max_block:
        return size_a, size_a
    nblocks = -(-size_a // max_block)                    # cdiv
    block = _round_up(-(-size_a // nblocks), align)      # <= max_block by construction
    return block, block * nblocks


def _alpha_mul_2d(x2, a2):
    """x2: (rows, cols); a2: (a_rows, cols) with a_rows == 1 (row broadcast) or
    a_rows > 1 with rows % a_rows == 0 (folded layout, one alpha group per tile)."""
    rows, cols = x2.shape
    a_rows = a2.shape[0]
    itemsize = jnp.dtype(x2.dtype).itemsize
    sub = _sublane_multiple(itemsize)

    if a_rows == 1:
        block_n, rows_p = _split_dim(rows, sub, _MAX_ROW_BLOCK)
    else:
        # Folded layout: one tile covers exactly one alpha row-group.
        block_n, rows_p = a_rows, rows

    lane_budget = max(_LANE,
                      (_TARGET_TILE_BYTES // (block_n * itemsize)) // _LANE * _LANE)
    block_f, cols_p = _split_dim(cols, _LANE, lane_budget)

    # Pad only when needed (zero-padding is harmless for a multiply; sliced off below).
    if rows_p != rows or cols_p != cols:
        x2 = jnp.pad(x2, ((0, rows_p - rows), (0, cols_p - cols)))
    if cols_p != cols:
        a2 = jnp.pad(a2, ((0, 0), (0, cols_p - cols)))

    # Grid: lane (F) axis outer/slow, row axis inner/fast, so alpha's block index
    # (0, j) is constant across the inner loop and its tile stays VMEM-resident.
    grid = (cols_p // block_f, rows_p // block_n)

    out_p = pl.pallas_call(
        _alpha_mul_kernel,
        out_shape=jax.ShapeDtypeStruct((rows_p, cols_p), x2.dtype),
        grid=grid,
        in_specs=[
            pl.BlockSpec((block_n, block_f), lambda j, i: (i, j)),
            pl.BlockSpec((a_rows, block_f), lambda j, i: (0, j)),
        ],
        out_specs=pl.BlockSpec((block_n, block_f), lambda j, i: (i, j)),
        compiler_params=pltpu.CompilerParams(
            dimension_semantics=("parallel", "parallel"),
            vmem_limit_bytes=_VMEM_LIMIT_BYTES,
        ),
    )(x2, a2)

    if rows_p != rows or cols_p != cols:
        out_p = out_p[:rows, :cols]
    return out_p


def alpha_module_forward(x, alpha, *, min_pallas_elements=1 << 18):
    """AlphaModule.forward: x * alpha, alpha shape (1, *x.shape[1:])."""
    if not (alpha.shape[0] == 1 and alpha.shape[1:] == x.shape[1:]):
        raise ValueError(f"alpha shape {alpha.shape} incompatible with x {x.shape}")

    # Size gate: tiny shapes stay in fused XLA (Pallas launch overhead dominates).
    if x.size < min_pallas_elements:
        return x * alpha

    n = x.shape[0]
    feat = math.prod(x.shape[1:])
    sub = _sublane_multiple(jnp.dtype(x.dtype).itemsize)

    # Sublane-dense "folded" layout when the batch dim alone under-fills sublanes:
    # x -> (N*R, Fc), alpha -> (R, Fc), with R a multiple of the sublane packing and
    # Fc a multiple of 128, so every vreg row carries real data (no 4x-wasted BW).
    if n % sub != 0 and x.ndim >= 3:
        trailing = x.shape[1:]
        for k in range(1, len(trailing)):
            r = math.prod(trailing[:k])
            fc = math.prod(trailing[k:])
            if r % sub == 0 and r <= 1024 and fc % _LANE == 0:
                out2 = _alpha_mul_2d(x.reshape(n * r, fc), alpha.reshape(r, fc))
                return out2.reshape(x.shape)

    # Generic layout: rows = batch, lanes = flattened features (alpha row-broadcast).
    out2 = _alpha_mul_2d(x.reshape(n, feat), alpha.reshape(1, feat))
    return out2.reshape(x.shape)


if __name__ == "__main__":
    key = jax.random.PRNGKey(0)
    k_alpha, k_x, k_alpha2, k_x2 = jax.random.split(key, 4)

    # AlphaModule(shape=(4, 16, 16)) applied to a batch of 2 NCHW tensors.
    N, C, H, W = 2, 4, 16, 16
    alpha = jax.random.uniform(k_alpha, (1, C, H, W), dtype=jnp.float32) * 0.1
    x = jax.random.normal(k_x, (N, C, H, W), dtype=jnp.float32)

    # Force the Pallas path for the small demo (real use keeps the XLA size gate).
    out = alpha_module_forward(x, alpha, min_pallas_elements=0)
    jax.block_until_ready(out)
    ref = x * alpha
    assert out.shape == x.shape and out.dtype == x.dtype
    assert jnp.allclose(out, ref, atol=1e-6, rtol=1e-6)

    # Second small case exercising the sublane-dense folded layout (C % 8 == 0).
    N2, C2, H2, W2 = 2, 8, 16, 16
    alpha2 = jax.random.uniform(k_alpha2, (1, C2, H2, W2), dtype=jnp.float32) * 0.1
    x2 = jax.random.normal(k_x2, (N2, C2, H2, W2), dtype=jnp.float32)
    out2 = alpha_module_forward(x2, alpha2, min_pallas_elements=0)
    jax.block_until_ready(out2)
    assert jnp.allclose(out2, x2 * alpha2, atol=1e-6, rtol=1e-6)

    # Gate path (tiny input stays in fused XLA) still matches the reference.
    out_gated = alpha_module_forward(x, alpha)
    assert jnp.allclose(out_gated, ref, atol=1e-6, rtol=1e-6)

    print("KERNEL_OK")
</pallas_src>

<mosaic_0001>
module attributes {stable_mosaic.version = 11 : i64} {
  func.func @_alpha_mul_kernel(%arg0: i32, %arg1: i32, %arg2: memref<8x1024xf32, #tpu.memory_space<vmem>>, %arg3: memref<1x1024xf32, #tpu.memory_space<vmem>>, %arg4: memref<8x1024xf32, #tpu.memory_space<vmem>>) attributes {dimension_semantics = [#tpu.dimension_semantics<parallel>, #tpu.dimension_semantics<parallel>], iteration_bounds = array<i64: 1, 1>, scalar_prefetch = 0 : i64, scratch_operands = 0 : i64, tpu.core_type = #tpu.core_type<tc>, window_params = [{transform_indices = @transform_0, window_bounds = array<i64: 8, 1024>}, {transform_indices = @transform_1, window_bounds = array<i64: 1, 1024>}, {transform_indices = @transform_2, window_bounds = array<i64: 8, 1024>}]} {
    %c0 = arith.constant 0 : index
    %c0_0 = arith.constant 0 : index
    %0 = vector.load %arg2[%c0, %c0_0] : memref<8x1024xf32, #tpu.memory_space<vmem>>, vector<8x1024xf32>
    %c0_1 = arith.constant 0 : index
    %c0_2 = arith.constant 0 : index
    %1 = vector.load %arg3[%c0_1, %c0_2] : memref<1x1024xf32, #tpu.memory_space<vmem>>, vector<1x1024xf32>
    %2 = vector.broadcast %1 : vector<1x1024xf32> to vector<8x1024xf32>
    %3 = arith.mulf %0, %2 : vector<8x1024xf32>
    %c0_3 = arith.constant 0 : index
    %c0_4 = arith.constant 0 : index
    %4 = vector.load %arg4[%c0_3, %c0_4] : memref<8x1024xf32, #tpu.memory_space<vmem>>, vector<8x1024xf32>
    tpu.vector_store %arg4[%c0_3, %c0_4], %3 {strides = array<i32>} : memref<8x1024xf32, #tpu.memory_space<vmem>>, vector<8x1024xf32>,
    return
  }
  func.func @transform_0(%arg0: i32, %arg1: i32) -> (i32, i32) {
    %c0_i32 = arith.constant 0 : i32
    return %arg1, %arg0 : i32, i32
  }
  func.func @transform_1(%arg0: i32, %arg1: i32) -> (i32, i32) {
    %c0_i32 = arith.constant 0 : i32
    %c0_i32_0 = arith.constant 0 : i32
    return %c0_i32, %arg0 : i32, i32
  }
  func.func @transform_2(%arg0: i32, %arg1: i32) -> (i32, i32) {
    %c0_i32 = arith.constant 0 : i32
    return %arg1, %arg0 : i32, i32
  }
}

</mosaic_0001>

<llo_original>
// kernel: tpu_custom_call.1
$region0: #{tpu_custom_call.1}
  #allocation0 [shape = 'u32[]', space=smem, size = 0x4, offset = 0x4, fixed_abs, tag = 'smem constant byte address 0x4 - core index']
  #allocation1 [shape = 'u32[144,128]{1,0:T(1,128)}', space=vmem, size = 0x12000, scoped, tag = 'internal scratch']
  %s0 = inlined_call_operand.hbm [shape: f32[8,1024], index: 0, kind: input, shape index: {}]
  %s1 = inlined_call_operand.hbm [shape: f32[1,1024], index: 1, kind: input, shape index: {}]
  %s2 = inlined_call_operand.hbm [shape: f32[8,1024], index: 2, kind: output, shape index: {}]
  %s3 = sld [smem:[#allocation0]]
  $region26: #{tpu_custom_call.1} parent=0
    _
  %s5 = ssub.s32 1, %s3
  %s6 = scalar_select 0, %s5, %s3
  $region1: #{tpu_custom_call.1} parent=0
    #allocation2 [shape = 'u8[32768]{0}', space=vmem, size = 0x8000, scoped, tag = 'input window, operand 0, single buffered']
    #allocation3 [shape = 's32[1]{0}', space=sflag, size = 0x4, scoped, tag = 'scoped memory for tpu_custom_call.1']
    #allocation4 [shape = 's32[1]{0}', space=sflag, size = 0x4, scoped, tag = 'scoped memory for tpu_custom_call.1']
    #allocation5 [shape = 'u8[4096]{0}', space=vmem, size = 0x1000, scoped, tag = 'input window, operand 1, single buffered']
    #allocation6 [shape = 's32[1]{0}', space=sflag, size = 0x4, scoped, tag = 'scoped memory for tpu_custom_call.1']
    #allocation7 [shape = 'u8[32768]{0}', space=vmem, size = 0x8000, scoped, tag = 'output window, operand 0, single buffered']
    %7 = vsyncpa [#allocation3], 0
    %8 = vsyncpa [#allocation6], 0
    %9 = vsyncpa [#allocation4], 0
    // Predicated region
    $region2: #{tpu_custom_call.1} parent=1 // pred_check
      _
    $region3: #{tpu_custom_call.1} parent=1 // pred_check_branch
      %11 = sbr.rel (0) target = $region5
    $region4: #{tpu_custom_call.1} parent=1 // pred_region
      %s13 = ssub.s32 1024, 1024
      %14 = vsyncadd [#allocation3], %s13
      %s16 = sshll.u32 [#allocation2], 4
      %s17 = int_to_ptr.vmem [resolvable:$true] %s16
      %19 = dma.hbm_to_vmem [thread:$0]  %s0, 1024, %s17, [#allocation3]
    $region5: #{tpu_custom_call.1} parent=1 // pred_fallthru
      _
    // Predicated region
    $region6: #{tpu_custom_call.1} parent=1 // pred_check
      _
    $region7: #{tpu_custom_call.1} parent=1 // pred_check_branch
      %21 = sbr.rel (0) target = $region9
    $region8: #{tpu_custom_call.1} parent=1 // pred_region
      %s23 = ssub.s32 128, 128
      %24 = vsyncadd [#allocation6], %s23
      %s26 = sshll.u32 [#allocation5], 4
      %s27 = int_to_ptr.vmem [resolvable:$true] %s26
      %29 = dma.hbm_to_vmem [thread:$0]  %s1, 128, %s27, [#allocation6]
    $region9: #{tpu_custom_call.1} parent=1 // pred_fallthru
      _
    // Predicated region
    $region10: #{tpu_custom_call.1} parent=1 // pred_check
      _
    $region11: #{tpu_custom_call.1} parent=1 // pred_check_branch
      %31 = sbr.rel (0) target = $region13
    $region12: #{tpu_custom_call.1} parent=1 // pred_region
      %32 = dma.done [#allocation3], 1024
    $region13: #{tpu_custom_call.1} parent=1 // pred_fallthru
      _
    // Predicated region
    $region14: #{tpu_custom_call.1} parent=1 // pred_check
      _
    $region15: #{tpu_custom_call.1} parent=1 // pred_check_branch
      %34 = sbr.rel (0) target = $region17
    $region16: #{tpu_custom_call.1} parent=1 // pred_region
      %35 = dma.done [#allocation6], 128
    $region17: #{tpu_custom_call.1} parent=1 // pred_fallthru
      _
    %v36 = vld [vmem:[#allocation2] sm:$0xff]
    %v37 = vld [vmem:[#allocation2 + $0x8] sm:$0xff]
    %v38 = vld [vmem:[#allocation2 + $0x10] sm:$0xff]
    %v39 = vld [vmem:[#allocation2 + $0x18] sm:$0xff]
    %v40 = vld [vmem:[#allocation2 + $0x20] sm:$0xff]
    %v41 = vld [vmem:[#allocation2 + $0x28] sm:$0xff]
    %v42 = vld [vmem:[#allocation2 + $0x30] sm:$0xff]
    %v43 = vld [vmem:[#allocation2 + $0x38] sm:$0xff]
    %v44 = vld [vmem:[#allocation5] sm:$0xff]
    %v46 = vlaneseq
    %v47 = vshrl.u32 %v46, 7
    %v48 = vsub.s32 0, %v47
    %v49 = vrot.slane %v44, %v48
    %v50 = vlaneseq
    %v51 = vshrl.u32 %v50, 7
    %v52 = vsub.s32 1, %v51
    %v53 = vrot.slane %v44, %v52
    %v54 = vlaneseq
    %v55 = vshrl.u32 %v54, 7
    %v56 = vsub.s32 2, %v55
    %v57 = vrot.slane %v44, %v56
    %v58 = vlaneseq
    %v59 = vshrl.u32 %v58, 7
    %v60 = vsub.s32 3, %v59
    %v61 = vrot.slane %v44, %v60
    %v62 = vlaneseq
    %v63 = vshrl.u32 %v62, 7
    %v64 = vsub.s32 4, %v63
    %v65 = vrot.slane %v44, %v64
    %v66 = vlaneseq
    %v67 = vshrl.u32 %v66, 7
    %v68 = vsub.s32 5, %v67
    %v69 = vrot.slane %v44, %v68
    %v70 = vlaneseq
    %v71 = vshrl.u32 %v70, 7
    %v72 = vsub.s32 6, %v71
    %v73 = vrot.slane %v44, %v72
    %v74 = vlaneseq
    %v75 = vshrl.u32 %v74, 7
    %v76 = vsub.s32 7, %v75
    %v77 = vrot.slane %v44, %v76
    %v86 = vmul.f32 %v36, %v49
    %v87 = vmul.f32 %v37, %v53
    %v88 = vmul.f32 %v38, %v57
    %v89 = vmul.f32 %v39, %v61
    %v90 = vmul.f32 %v40, %v65
    %v91 = vmul.f32 %v41, %v69
    %v92 = vmul.f32 %v42, %v73
    %v93 = vmul.f32 %v43, %v77
    %94 = vst [vmem:[#allocation7] sm:$0xff] %v86
    %95 = vst [vmem:[#allocation7 + $0x8] sm:$0xff] %v87
    %96 = vst [vmem:[#allocation7 + $0x10] sm:$0xff] %v88
    %97 = vst [vmem:[#allocation7 + $0x18] sm:$0xff] %v89
    %98 = vst [vmem:[#allocation7 + $0x20] sm:$0xff] %v90
    %99 = vst [vmem:[#allocation7 + $0x28] sm:$0xff] %v91
    %100 = vst [vmem:[#allocation7 + $0x30] sm:$0xff] %v92
    %101 = vst [vmem:[#allocation7 + $0x38] sm:$0xff] %v93
    // Predicated region
    $region18: #{tpu_custom_call.1} parent=1 // pred_check
      _
    $region19: #{tpu_custom_call.1} parent=1 // pred_check_branch
      %103 = sbr.rel (0) target = $region21
    $region20: #{tpu_custom_call.1} parent=1 // pred_region
      %s105 = ssub.s32 1024, 1024
      %106 = vsyncadd [#allocation4], %s105
      %s108 = sshll.u32 [#allocation7], 4
      %s109 = int_to_ptr.vmem [resolvable:$true] %s108
      %111 = dma.vmem_to_hbm [thread:$0]  %s109, 1024, %s2, [#allocation4]
    $region21: #{tpu_custom_call.1} parent=1 // pred_fallthru
      _
    // Predicated region
    $region22: #{tpu_custom_call.1} parent=1 // pred_check
      _
    $region23: #{tpu_custom_call.1} parent=1 // pred_check_branch
      %113 = sbr.rel (0) target = $region25
    $region24: #{tpu_custom_call.1} parent=1 // pred_region
      %114 = dma.done [#allocation4], 1024
    $region25: #{tpu_custom_call.1} parent=1 // pred_fallthru
      _
    %115 = vsyncpa [#allocation3], 1
    %116 = vsyncpa [#allocation6], 1
    %117 = vsyncpa [#allocation4], 1

</llo_original>
